<compile_context>
chip_gen: v7x
topology: tpu7x:2x2x1
jax: 0.10.0
libtpu: 0.0.40
codegen_flags: <defaults>
</compile_context>

<pallas_src>
import functools
import math

import jax
import jax.numpy as jnp
from jax.experimental import pallas as pl
from jax.experimental.pallas import tpu as pltpu


# ------------------------------- generation-aware sizing -------------------------------

def _tpu_vmem_capacity():
    try:
        return int(pltpu.get_tpu_info().vmem_capacity_bytes)
    except Exception:
        return 64 * 1024 * 1024  # conservative fallback (v7x per-TC VMEM)


_VMEM_CAP = _tpu_vmem_capacity()
_VMEM_LIMIT = min(int(_VMEM_CAP * 0.75), 112 * 1024 * 1024)

if _VMEM_CAP >= 100 * 1024 * 1024:      # v5e / v6e: 128 MiB VMEM per TensorCore
    _TM_PREF, _TN_PREF, _TK_PREF = 512, 512, 1024
else:                                   # v7x: 64 MiB per TensorCore
    _TM_PREF, _TN_PREF, _TK_PREF = 256, 512, 512


def _pick_tile(dim, pref, aligns=(8,)):
    """Largest tile <= pref that divides dim and is aligned to one of `aligns`
    (tried in order); falls back to the full dim."""
    if dim <= pref:
        return dim
    for align in aligns:
        t = (pref // align) * align
        while t >= align:
            if dim % t == 0:
                return t
            t -= align
    return dim


# ------------------------------- dense (matmul + bias [+ GELU]) -------------------------------

def _dense_kernel(x_ref, w_ref, b_ref, o_ref, acc_ref, *, activation):
    @pl.when(pl.program_id(2) == 0)
    def _():
        acc_ref[...] = jnp.zeros_like(acc_ref)

    # bf16 operands straight from HBM; f32 accumulation on the MXU.
    acc_ref[...] += jnp.dot(x_ref[...], w_ref[...], preferred_element_type=jnp.float32)

    @pl.when(pl.program_id(2) == pl.num_programs(2) - 1)
    def _():
        y = acc_ref[...] + b_ref[...]            # bias kept f32: epilogue math stays f32
        if activation == "gelu":
            c = math.sqrt(2.0 / math.pi)
            y = 0.5 * y * (1.0 + jnp.tanh(c * (y + 0.044715 * y * y * y)))
        o_ref[...] = y.astype(o_ref.dtype)


def dense(x, w, b, activation=None, out_dtype=jnp.bfloat16):
    """x:[M,K] (bf16) @ w:[K,N] (bf16) + b:[N] (f32); f32 accumulator; bf16/f32 output."""
    M, K = x.shape
    N = w.shape[1]
    tn = _pick_tile(N, _TN_PREF, (256, 128))
    tk = _pick_tile(K, _TK_PREF, (256, 128))
    tm = _pick_tile(M, _TM_PREF, (16,))
    if tm == M and M > 2 * _TM_PREF:
        tm = _TM_PREF                            # ragged large M: pad rather than one giant block
    # Megacore occupancy: keep >= 2 blocks on the parallel (M, N) axes when possible.
    if pl.cdiv(M, tm) * (N // tn) < 2 and tm >= 32:
        cand = _pick_tile(M, tm // 2, (16,))
        if cand < tm:
            tm = cand
    Mp = pl.cdiv(M, tm) * tm
    x_p = x if Mp == M else jnp.pad(x, ((0, Mp - M), (0, 0)))

    kern = functools.partial(_dense_kernel, activation=activation)
    out = pl.pallas_call(
        kern,
        out_shape=jax.ShapeDtypeStruct((Mp, N), out_dtype),
        grid_spec=pltpu.PrefetchScalarGridSpec(
            num_scalar_prefetch=0,
            grid=(Mp // tm, N // tn, K // tk),
            in_specs=[pl.BlockSpec((tm, tk), lambda i, j, k: (i, k)),
                      pl.BlockSpec((tk, tn), lambda i, j, k: (k, j)),
                      pl.BlockSpec((1, tn), lambda i, j, k: (0, j))],
            out_specs=pl.BlockSpec((tm, tn), lambda i, j, k: (i, j)),
            scratch_shapes=[pltpu.VMEM((tm, tn), jnp.float32)]),
        compiler_params=pltpu.CompilerParams(
            dimension_semantics=("parallel", "parallel", "arbitrary"),
            vmem_limit_bytes=_VMEM_LIMIT),
    )(x_p, w, b.reshape(1, N))
    return out if Mp == M else out[:M]


# ------------------------------- layer norm (optionally fused residual) -------------------------------

def _ln_kernel(x_ref, g_ref, b_ref, o_ref, *, eps):
    x = x_ref[...].astype(jnp.float32)
    mu = jnp.mean(x, axis=-1, keepdims=True)
    xc = x - mu
    var = jnp.mean(xc * xc, axis=-1, keepdims=True)
    inv = jax.lax.rsqrt(var + eps)
    o_ref[...] = (xc * inv * g_ref[...] + b_ref[...]).astype(o_ref.dtype)


def _add_ln_kernel(x_ref, r_ref, g_ref, b_ref, o_ref, *, eps):
    x = x_ref[...].astype(jnp.float32) + r_ref[...].astype(jnp.float32)
    mu = jnp.mean(x, axis=-1, keepdims=True)
    xc = x - mu
    var = jnp.mean(xc * xc, axis=-1, keepdims=True)
    inv = jax.lax.rsqrt(var + eps)
    o_ref[...] = (xc * inv * g_ref[...] + b_ref[...]).astype(o_ref.dtype)


def _ln_call(kern, row_arrays, vec_arrays, M, H):
    tm = _pick_tile(M, 512, (16,))
    if tm == M and M > 1024:
        tm = 512
    if pl.cdiv(M, tm) < 2 and tm >= 32:          # megacore occupancy guard
        cand = _pick_tile(M, tm // 2, (16,))
        if cand < tm:
            tm = cand
    Mp = pl.cdiv(M, tm) * tm
    if Mp != M:
        row_arrays = [jnp.pad(a, ((0, Mp - M), (0, 0))) for a in row_arrays]

    row_spec = pl.BlockSpec((tm, H), lambda i: (i, 0))
    vec_spec = pl.BlockSpec((1, H), lambda i: (0, 0))
    out = pl.pallas_call(
        kern,
        out_shape=jax.ShapeDtypeStruct((Mp, H), jnp.bfloat16),
        grid_spec=pltpu.PrefetchScalarGridSpec(
            num_scalar_prefetch=0,
            grid=(Mp // tm,),
            in_specs=[row_spec] * len(row_arrays) + [vec_spec] * len(vec_arrays),
            out_specs=row_spec),
        compiler_params=pltpu.CompilerParams(
            dimension_semantics=("parallel",),
            vmem_limit_bytes=_VMEM_LIMIT),
    )(*row_arrays, *vec_arrays)
    return out if Mp == M else out[:M]


def layer_norm(x, gamma, beta, eps=1e-12):
    M, H = x.shape
    kern = functools.partial(_ln_kernel, eps=eps)
    return _ln_call(kern, [x], [gamma.reshape(1, H), beta.reshape(1, H)], M, H)


def add_layer_norm(x, res, gamma, beta, eps=1e-12):
    """LayerNorm(x + res) with the residual add fused into the kernel."""
    M, H = x.shape
    kern = functools.partial(_add_ln_kernel, eps=eps)
    return _ln_call(kern, [x, res], [gamma.reshape(1, H), beta.reshape(1, H)], M, H)


# ------------------------------- flash-style attention -------------------------------

def _flash_attn_kernel(q_ref, k_ref, v_ref, m_ref, o_ref, m_sc, l_sc, acc_sc):
    ki = pl.program_id(2)

    @pl.when(ki == 0)
    def _():
        m_sc[...] = jnp.full(m_sc.shape, -jnp.inf, dtype=m_sc.dtype)
        l_sc[...] = jnp.zeros_like(l_sc)
        acc_sc[...] = jnp.zeros_like(acc_sc)

    q = q_ref[...]                              # (1, tq, dH) bf16; softmax scale baked into W_q
    k = k_ref[...]                              # (1, tk, dH) bf16
    v = v_ref[...]                              # (1, tk, dH) bf16
    msk = m_ref[...].astype(jnp.float32)        # (1, 1, tk) key-padding mask (1=keep, 0=pad)

    s = jnp.einsum("bqd,bkd->bqk", q, k, preferred_element_type=jnp.float32)
    s = s + (1.0 - msk) * (-1e9)                # broadcast over queries; f32 softmax math

    m_prev = m_sc[...]
    m_new = jnp.maximum(m_prev, jnp.max(s, axis=-1, keepdims=True))
    alpha = jnp.exp(m_prev - m_new)
    p = jnp.exp(s - m_new)
    l_sc[...] = alpha * l_sc[...] + jnp.sum(p, axis=-1, keepdims=True)
    acc_sc[...] = alpha * acc_sc[...] + jnp.einsum(
        "bqk,bkd->bqd", p.astype(jnp.bfloat16), v, preferred_element_type=jnp.float32)
    m_sc[...] = m_new

    @pl.when(ki == pl.num_programs(2) - 1)
    def _():
        o_ref[...] = (acc_sc[...] * pl.reciprocal(l_sc[...], approx=True)).astype(o_ref.dtype)


def attention(q, k, v, mask_bh):
    """q,k,v: [B*nH, S, dH] bf16; mask_bh: [B*nH, 1, S] f32. Online-softmax flash attention."""
    BH, S, dH = q.shape
    tq = _pick_tile(S, 512, (16,))
    tk = _pick_tile(S, 512, (256, 128))
    grid = (BH, S // tq, S // tk)
    return pl.pallas_call(
        _flash_attn_kernel,
        out_shape=jax.ShapeDtypeStruct((BH, S, dH), jnp.bfloat16),
        grid_spec=pltpu.PrefetchScalarGridSpec(
            num_scalar_prefetch=0,
            grid=grid,
            in_specs=[pl.BlockSpec((1, tq, dH), lambda b, qi, ki: (b, qi, 0)),
                      pl.BlockSpec((1, tk, dH), lambda b, qi, ki: (b, ki, 0)),
                      pl.BlockSpec((1, tk, dH), lambda b, qi, ki: (b, ki, 0)),
                      pl.BlockSpec((1, 1, tk), lambda b, qi, ki: (b, 0, ki))],
            out_specs=pl.BlockSpec((1, tq, dH), lambda b, qi, ki: (b, qi, 0)),
            scratch_shapes=[pltpu.VMEM((1, tq, 1), jnp.float32),
                            pltpu.VMEM((1, tq, 1), jnp.float32),
                            pltpu.VMEM((1, tq, dH), jnp.float32)]),
        compiler_params=pltpu.CompilerParams(
            dimension_semantics=("parallel", "parallel", "arbitrary"),
            vmem_limit_bytes=_VMEM_LIMIT),
    )(q, k, v, mask_bh)


# ------------------------------- model (glue) -------------------------------

class Config:
    vocab_size = 100
    hidden_size = 32
    num_heads = 2
    intermediate_size = 64
    num_layers = 2
    max_position = 16
    type_vocab_size = 2
    num_labels = 3


def init_params(key, cfg):
    """Weights are generated in f32 and prepared (fused, scaled, padded, cast to bf16) once
    here, so no per-forward weight preparation remains in the model."""
    def nrm(k, shape):
        return 0.02 * jax.random.normal(k, shape, dtype=jnp.float32)

    keys = iter(jax.random.split(key, 8 + 8 * cfg.num_layers))
    H, I, nH = cfg.hidden_size, cfg.intermediate_size, cfg.num_heads
    dH = H // nH
    scale = 1.0 / math.sqrt(dH)
    bf = jnp.bfloat16

    params = {
        "num_heads": nH,
        "num_labels": cfg.num_labels,
        "word_emb": nrm(next(keys), (cfg.vocab_size, H)).astype(bf),
        "pos_emb": nrm(next(keys), (cfg.max_position, H)).astype(bf),
        "type_emb": nrm(next(keys), (cfg.type_vocab_size, H)).astype(bf),
        "emb_ln_g": jnp.ones((H,), jnp.float32),
        "emb_ln_b": jnp.zeros((H,), jnp.float32),
        "layers": [],
    }
    for _ in range(cfg.num_layers):
        q_w, k_w, v_w = nrm(next(keys), (H, H)), nrm(next(keys), (H, H)), nrm(next(keys), (H, H))
        zH = jnp.zeros((H,), jnp.float32)
        params["layers"].append({
            # fused QKV weight with the 1/sqrt(dH) softmax scale baked into the Q columns.
            "qkv_w": jnp.concatenate([q_w * scale, k_w, v_w], axis=1).astype(bf),
            "qkv_b": jnp.concatenate([zH * scale, zH, zH], axis=0),
            "ao_w": nrm(next(keys), (H, H)).astype(bf), "ao_b": jnp.zeros((H,), jnp.float32),
            "ln1_g": jnp.ones((H,), jnp.float32), "ln1_b": jnp.zeros((H,), jnp.float32),
            "ff1_w": nrm(next(keys), (H, I)).astype(bf), "ff1_b": jnp.zeros((I,), jnp.float32),
            "ff2_w": nrm(next(keys), (I, H)).astype(bf), "ff2_b": jnp.zeros((H,), jnp.float32),
            "ln2_g": jnp.ones((H,), jnp.float32), "ln2_b": jnp.zeros((H,), jnp.float32),
        })
    # classifier head pre-padded to a lane-dense 128-wide matmul (hoisted prep).
    n_pad = max(128, -(-cfg.num_labels // 128) * 128)
    cls_w = nrm(next(keys), (H, cfg.num_labels))
    params["cls_w_pad"] = (jnp.zeros((H, n_pad), jnp.float32)
                           .at[:, :cfg.num_labels].set(cls_w).astype(bf))
    params["cls_b_pad"] = jnp.zeros((n_pad,), jnp.float32)
    return params


def bert_layer(x, mask_bh, p, B, S, nH):
    H = x.shape[-1]
    dH = H // nH

    # Fused QKV projection: one [H, 3H] matmul instead of three [H, H] matmuls.
    qkv = dense(x, p["qkv_w"], p["qkv_b"])              # [B*S, 3H] bf16
    q, k, v = jnp.split(qkv, 3, axis=1)

    def split_heads(t):  # [B*S, H] -> [B*nH, S, dH]
        return t.reshape(B, S, nH, dH).transpose(0, 2, 1, 3).reshape(B * nH, S, dH)

    # TODO(synk): fold head split/merge into the QKV out_spec / attention out layout to drop
    #             these two transpose round-trips (needs dynamic lane-offset stores).
    ctx = attention(split_heads(q), split_heads(k), split_heads(v), mask_bh)
    ctx = ctx.reshape(B, nH, S, dH).transpose(0, 2, 1, 3).reshape(B * S, H)

    attn_out = dense(ctx, p["ao_w"], p["ao_b"])
    x = add_layer_norm(attn_out, x, p["ln1_g"], p["ln1_b"])     # LN(attn_out + x), fused add

    h = dense(x, p["ff1_w"], p["ff1_b"], activation="gelu")
    ff_out = dense(h, p["ff2_w"], p["ff2_b"])
    x = add_layer_norm(ff_out, x, p["ln2_g"], p["ln2_b"])       # LN(ff_out + x), fused add
    return x


def bert_for_token_classification(params, input_ids, attention_mask=None, token_type_ids=None):
    """Mirrors BertForTokenClassification.forward: bert(...) -> last_hidden_state -> classifier."""
    B, S = input_ids.shape
    H = params["word_emb"].shape[1]
    nH = params["num_heads"]
    num_labels = params["num_labels"]
    if attention_mask is None:
        attention_mask = jnp.ones((B, S), jnp.float32)
    if token_type_ids is None:
        token_type_ids = jnp.zeros((B, S), jnp.int32)

    # embeddings (gathers are plain-JAX glue); activations live in bf16 in HBM
    x = (jnp.take(params["word_emb"], input_ids, axis=0)
         + params["pos_emb"][None, :S, :]
         + jnp.take(params["type_emb"], token_type_ids, axis=0))
    x = x.reshape(B * S, H)
    x = layer_norm(x, params["emb_ln_g"], params["emb_ln_b"])

    # key-padding mask replicated per head: [B*nH, 1, S] (row order matches head split)
    mask_bh = jnp.repeat(attention_mask.astype(jnp.float32), nH, axis=0)[:, None, :]

    for layer_params in params["layers"]:
        x = bert_layer(x, mask_bh, layer_params, B, S, nH)

    # classifier: lane-dense pre-padded weight, f32 logits, slice back to num_labels
    logits = dense(x, params["cls_w_pad"], params["cls_b_pad"], out_dtype=jnp.float32)
    logits = logits[:, :num_labels]
    return logits.reshape(B, S, num_labels)


# ------------------------------- main -------------------------------

if __name__ == "__main__":
    cfg = Config()
    key = jax.random.PRNGKey(0)
    k_params, k_ids = jax.random.split(key)

    params = init_params(k_params, cfg)

    B, S = 2, 8
    input_ids = jax.random.randint(k_ids, (B, S), 0, cfg.vocab_size, dtype=jnp.int32)
    attention_mask = jnp.ones((B, S), jnp.float32).at[1, 6:].set(0.0)  # pad tail of 2nd example
    token_type_ids = jnp.zeros((B, S), jnp.int32)

    logits = bert_for_token_classification(params, input_ids, attention_mask, token_type_ids)
    jax.block_until_ready(logits)

    assert logits.shape == (B, S, cfg.num_labels), logits.shape
    assert logits.dtype == jnp.float32
    assert bool(jnp.all(jnp.isfinite(logits)))
    print("KERNEL_OK")
</pallas_src>

<mosaic_0001>
module attributes {stable_mosaic.version = 11 : i64} {
  func.func @_ln_kernel(%arg0: i32, %arg1: memref<16x32xbf16, #tpu.memory_space<vmem>>, %arg2: memref<1x32xf32, #tpu.memory_space<vmem>>, %arg3: memref<1x32xf32, #tpu.memory_space<vmem>>, %arg4: memref<16x32xbf16, #tpu.memory_space<vmem>>) attributes {dimension_semantics = [#tpu.dimension_semantics<parallel>], iteration_bounds = array<i64: 1>, scalar_prefetch = 0 : i64, scratch_operands = 0 : i64, tpu.core_type = #tpu.core_type<tc>, window_params = [{transform_indices = @transform_0, window_bounds = array<i64: 16, 32>}, {pipeline_mode = #tpu.pipeline_mode<synchronous>, transform_indices = @transform_1, window_bounds = array<i64: 1, 32>}, {pipeline_mode = #tpu.pipeline_mode<synchronous>, transform_indices = @transform_2, window_bounds = array<i64: 1, 32>}, {transform_indices = @transform_3, window_bounds = array<i64: 16, 32>}]} {
    %c0 = arith.constant 0 : index
    %c0_0 = arith.constant 0 : index
    %0 = vector.load %arg1[%c0, %c0_0] : memref<16x32xbf16, #tpu.memory_space<vmem>>, vector<16x32xbf16>
    %1 = arith.extf %0 : vector<16x32xbf16> to vector<16x32xf32>
    %cst = arith.constant dense<0.000000e+00> : vector<16xf32>
    %2 = vector.multi_reduction <add>, %1, %cst [1] : vector<16x32xf32> to vector<16xf32>
    %3 = vector.shape_cast %2 : vector<16xf32> to vector<16x1xf32>
    %cst_1 = arith.constant 3.200000e+01 : f32
    %4 = vector.broadcast %cst_1 : f32 to vector<16x1xf32>
    %5 = arith.divf %3, %4 : vector<16x1xf32>
    %6 = vector.broadcast %5 : vector<16x1xf32> to vector<16x32xf32>
    %7 = arith.subf %1, %6 : vector<16x32xf32>
    %8 = arith.mulf %7, %7 : vector<16x32xf32>
    %cst_2 = arith.constant dense<0.000000e+00> : vector<16xf32>
    %9 = vector.multi_reduction <add>, %8, %cst_2 [1] : vector<16x32xf32> to vector<16xf32>
    %10 = vector.shape_cast %9 : vector<16xf32> to vector<16x1xf32>
    %cst_3 = arith.constant 3.200000e+01 : f32
    %11 = vector.broadcast %cst_3 : f32 to vector<16x1xf32>
    %12 = arith.divf %10, %11 : vector<16x1xf32>
    %cst_4 = arith.constant 9.99999996E-13 : f32
    %13 = vector.broadcast %cst_4 : f32 to vector<16x1xf32>
    %14 = arith.addf %12, %13 : vector<16x1xf32>
    %15 = math.rsqrt %14 : vector<16x1xf32>
    %16 = vector.broadcast %15 : vector<16x1xf32> to vector<16x32xf32>
    %17 = arith.mulf %7, %16 : vector<16x32xf32>
    %c0_5 = arith.constant 0 : index
    %c0_6 = arith.constant 0 : index
    %18 = vector.load %arg2[%c0_5, %c0_6] : memref<1x32xf32, #tpu.memory_space<vmem>>, vector<1x32xf32>
    %19 = vector.broadcast %18 : vector<1x32xf32> to vector<16x32xf32>
    %20 = arith.mulf %17, %19 : vector<16x32xf32>
    %c0_7 = arith.constant 0 : index
    %c0_8 = arith.constant 0 : index
    %21 = vector.load %arg3[%c0_7, %c0_8] : memref<1x32xf32, #tpu.memory_space<vmem>>, vector<1x32xf32>
    %22 = vector.broadcast %21 : vector<1x32xf32> to vector<16x32xf32>
    %23 = arith.addf %20, %22 : vector<16x32xf32>
    %24 = arith.truncf %23 : vector<16x32xf32> to vector<16x32xbf16>
    %c0_9 = arith.constant 0 : index
    %c0_10 = arith.constant 0 : index
    %25 = vector.load %arg4[%c0_9, %c0_10] : memref<16x32xbf16, #tpu.memory_space<vmem>>, vector<16x32xbf16>
    tpu.vector_store %arg4[%c0_9, %c0_10], %24 {strides = array<i32>} : memref<16x32xbf16, #tpu.memory_space<vmem>>, vector<16x32xbf16>,
    return
  }
  func.func @transform_0(%arg0: i32) -> (i32, i32) {
    %c0_i32 = arith.constant 0 : i32
    %c0_i32_0 = arith.constant 0 : i32
    return %arg0, %c0_i32 : i32, i32
  }
  func.func @transform_1(%arg0: i32) -> (i32, i32) {
    %c0_i32 = arith.constant 0 : i32
    %c0_i32_0 = arith.constant 0 : i32
    %c0_i32_1 = arith.constant 0 : i32
    return %c0_i32, %c0_i32_0 : i32, i32
  }
  func.func @transform_2(%arg0: i32) -> (i32, i32) {
    %c0_i32 = arith.constant 0 : i32
    %c0_i32_0 = arith.constant 0 : i32
    %c0_i32_1 = arith.constant 0 : i32
    return %c0_i32, %c0_i32_0 : i32, i32
  }
  func.func @transform_3(%arg0: i32) -> (i32, i32) {
    %c0_i32 = arith.constant 0 : i32
    %c0_i32_0 = arith.constant 0 : i32
    return %arg0, %c0_i32 : i32, i32
  }
}

</mosaic_0001>

<llo_original>
// kernel: tpu_custom_call.1
$region0: #{tpu_custom_call.1}
  #allocation0 [shape = 'u32[]', space=smem, size = 0x4, offset = 0x4, fixed_abs, tag = 'smem constant byte address 0x4 - core index']
  #allocation1 [shape = 'u32[144,128]{1,0:T(1,128)}', space=vmem, size = 0x12000, scoped, tag = 'internal scratch']
  %s0 = inlined_call_operand.hbm [shape: bf16[16,32], index: 0, kind: input, shape index: {}]
  %s1 = inlined_call_operand.vmem [shape: f32[1,32], index: 1, kind: input, shape index: {}]
  %s2 = inlined_call_operand.vmem [shape: f32[1,32], index: 2, kind: input, shape index: {}]
  %s3 = inlined_call_operand.hbm [shape: bf16[16,32], index: 3, kind: output, shape index: {}]
  %s4 = sld [smem:[#allocation0]]
  $region26: #{tpu_custom_call.1} parent=0
    _
  %s6 = ssub.s32 1, %s4
  %s7 = scalar_select 0, %s6, %s4
  $region1: #{tpu_custom_call.1} parent=0
    #allocation2 [shape = 'u8[4096]{0}', space=vmem, size = 0x1000, scoped, tag = 'input window, operand 0, single buffered']
    #allocation3 [shape = 's32[1]{0}', space=sflag, size = 0x4, scoped, tag = 'scoped memory for tpu_custom_call.1']
    #allocation4 [shape = 's32[1]{0}', space=sflag, size = 0x4, scoped, tag = 'scoped memory for tpu_custom_call.1']
    #allocation5 [shape = 'u8[4096]{0}', space=vmem, size = 0x1000, scoped, tag = 'output window, operand 0, single buffered']
    %8 = vsyncpa [#allocation3], 0
    %9 = vsyncpa [#allocation4], 0
    // Predicated region
    $region2: #{tpu_custom_call.1} parent=1 // pred_check
      _
    $region3: #{tpu_custom_call.1} parent=1 // pred_check_branch
      %11 = sbr.rel (0) target = $region5
    $region4: #{tpu_custom_call.1} parent=1 // pred_region
      %s13 = ssub.s32 128, 128
      %14 = vsyncadd [#allocation3], %s13
      %s15 = sshll.u32 [#allocation2], 4
      %s16 = int_to_ptr.vmem [resolvable:$true] %s15
      %21 = dma.hbm_to_vmem [thread:$0]  %s0, 128, %s16, [#allocation3], 64, 64, 4
    $region5: #{tpu_custom_call.1} parent=1 // pred_fallthru
      _
    // Predicated region
    $region6: #{tpu_custom_call.1} parent=1 // pred_check
      _
    $region7: #{tpu_custom_call.1} parent=1 // pred_check_branch
      %23 = sbr.rel (0) target = $region9
    $region8: #{tpu_custom_call.1} parent=1 // pred_region
      _
    $region9: #{tpu_custom_call.1} parent=1 // pred_fallthru
      _
    // Predicated region
    $region10: #{tpu_custom_call.1} parent=1 // pred_check
      _
    $region11: #{tpu_custom_call.1} parent=1 // pred_check_branch
      %25 = sbr.rel (0) target = $region13
    $region12: #{tpu_custom_call.1} parent=1 // pred_region
      _
    $region13: #{tpu_custom_call.1} parent=1 // pred_fallthru
      _
    // Predicated region
    $region14: #{tpu_custom_call.1} parent=1 // pred_check
      _
    $region15: #{tpu_custom_call.1} parent=1 // pred_check_branch
      %27 = sbr.rel (0) target = $region17
    $region16: #{tpu_custom_call.1} parent=1 // pred_region
      %28 = dma.done [#allocation3], 128
    $region17: #{tpu_custom_call.1} parent=1 // pred_fallthru
      _
    %v29 = vld [vmem:[#allocation2] sm:$0xf]
    %v30 = vld [vmem:[#allocation2 + $0x4] sm:$0xf]
    %v31 = vunpack.c.l.bf16 %v29
    %v32 = vunpack.c.l.bf16 %v30
    %vm33 = vcmask 261120
    %v34 = vsel %vm33, %v31, 0.0
    %35 = vadd.xlane.f32.xlu0 %v34
    %v36 = vpop.xlane.xlu0 %35
    %v37 = vsel %vm33, %v32, 0.0
    %38 = vadd.xlane.f32.xlu0 %v37
    %v39 = vpop.xlane.xlu0 %38
    %v40 = vrcp.pop 32.0
    %v41 = vmul.f32 %v36, %v40
    %v42 = vmul.f32 %v39, %v40
    %v43 = vsub.f32 %v31, %v41
    %v44 = vsub.f32 %v32, %v42
    %v45 = vmul.f32 %v43, %v43
    %v46 = vmul.f32 %v44, %v44
    %v47 = vsel %vm33, %v45, 0.0
    %48 = vadd.xlane.f32.xlu0 %v47
    %v49 = vpop.xlane.xlu0 %48
    %v50 = vsel %vm33, %v46, 0.0
    %51 = vadd.xlane.f32.xlu0 %v50
    %v52 = vpop.xlane.xlu0 %51
    %v53 = vmul.f32 %v49, %v40
    %v54 = vmul.f32 %v52, %v40
    %v55 = vadd.f32 %v53, 1e-12
    %v56 = vadd.f32 %v54, 1e-12
    %v57 = vrsqrt.pop %v55
    %v58 = vrsqrt.pop %v56
    %v59 = vmul.f32 %v43, %v57
    %v60 = vmul.f32 %v44, %v58
    %v61 = vld [vmem:[%s1] sm:$0x1]
    %v63 = vlaneseq
    %v64 = vshrl.u32 %v63, 7
    %v65 = vsub.s32 0, %v64
    %v66 = vrot.slane %v61, %v65
    %v68 = vmul.f32 %v59, %v66
    %v69 = vmul.f32 %v60, %v66
    %v70 = vld [vmem:[%s2] sm:$0x1]
    %v72 = vlaneseq
    %v73 = vshrl.u32 %v72, 7
    %v74 = vsub.s32 0, %v73
    %v75 = vrot.slane %v70, %v74
    %v77 = vadd.f32 %v68, %v75
    %v78 = vadd.f32 %v69, %v75
    %v79 = vpack.c.bf16 %v78, %v77
    %v81 = vunpack.c.l.b16 %v79
    %v82 = vunpack.c.h.b16 %v79
    %v83 = vpack.c.b16 %v81, %v81
    %v84 = vpack.c.b16 %v82, %v82
    %vm87 = vcmask 257024
    %88 = vst.msk [vmem:[#allocation5] sm:$0xf] %vm87, %v83
    %89 = vst.msk [vmem:[#allocation5 + $0x4] sm:$0xf] %vm87, %v84
    // Predicated region
    $region18: #{tpu_custom_call.1} parent=1 // pred_check
      _
    $region19: #{tpu_custom_call.1} parent=1 // pred_check_branch
      %91 = sbr.rel (0) target = $region21
    $region20: #{tpu_custom_call.1} parent=1 // pred_region
      %s93 = ssub.s32 128, 128
      %94 = vsyncadd [#allocation4], %s93
      %s95 = sshll.u32 [#allocation5], 4
      %s96 = int_to_ptr.vmem [resolvable:$true] %s95
      %101 = dma.vmem_to_hbm [thread:$0]  %s96, 128, %s3, [#allocation4], 64, 64, 4
    $region21: #{tpu_custom_call.1} parent=1 // pred_fallthru
      _
    // Predicated region
    $region22: #{tpu_custom_call.1} parent=1 // pred_check
      _
    $region23: #{tpu_custom_call.1} parent=1 // pred_check_branch
      %103 = sbr.rel (0) target = $region25
    $region24: #{tpu_custom_call.1} parent=1 // pred_region
      %104 = dma.done [#allocation4], 128
    $region25: #{tpu_custom_call.1} parent=1 // pred_fallthru
      _
    %105 = vsyncpa [#allocation3], 1
    %106 = vsyncpa [#allocation4], 1

</llo_original>
